<compile_context>
chip_gen: v6e
topology: v6e:2x2x1
jax: 0.10.0
libtpu: 0.0.40
codegen_flags: <defaults>
</compile_context>

<pallas_src>
import jax
import jax.numpy as jnp
from jax.experimental import pallas as pl
from jax.experimental.pallas import tpu as pltpu


# --------------------------------------------------------------------------
# Kernel
# --------------------------------------------------------------------------
def _dice_voe_stats_kernel(p_ref, g_ref, out_ref):
    """Accumulate per-(batch*channel)-row statistics over H*W tiles.

    p_ref/g_ref: (row_block, t) tiles of pred / GT (native dtype in HBM).
    out_ref:     (row_block, 4) f32 accumulator, VMEM-resident across k:
      col 0: sum(p * g)
      col 1: sum(p) + sum(g)
      col 2: sum(p >= .5 & g != 0)         (VOE intersection count)
      col 3: sum(p >= .5) + sum(g != 0)    (union via inclusion-exclusion)
    """
    k = pl.program_id(2)

    @pl.when(k == 0)
    def _init():
        out_ref[...] = jnp.zeros_like(out_ref)

    p = p_ref[...].astype(jnp.float32)
    g = g_ref[...].astype(jnp.float32)

    pbin = p >= 0.5
    gnz = g != 0.0

    # Four lane-reductions (down from six) + one coalesced accumulator add.
    s0 = jnp.sum(p * g, axis=-1, keepdims=True)
    s1 = jnp.sum(p + g, axis=-1, keepdims=True)
    s2 = jnp.sum((pbin & gnz).astype(jnp.float32), axis=-1, keepdims=True)
    s3 = jnp.sum(pbin.astype(jnp.float32) + gnz.astype(jnp.float32),
                 axis=-1, keepdims=True)

    out_ref[...] += jnp.concatenate([s0, s1, s2, s3], axis=-1)


# --------------------------------------------------------------------------
# Tiling helpers
# --------------------------------------------------------------------------
def _cdiv(a, b):
    return -(-a // b)


def _round_up(a, m):
    return _cdiv(a, m) * m


def _round_down(a, m):
    return (a // m) * m


def _vmem_capacity_bytes():
    """Per-core VMEM capacity; conservative v7x default if the query fails."""
    try:
        info = pltpu.get_tpu_info()
        cap = int(getattr(info, "vmem_capacity_bytes", 0) or 0)
        if cap > 0:
            return cap
    except Exception:
        pass
    return 64 * 1024 * 1024


def _plan_lane_tiling(hw, n_split, per_lane_bytes, budget_bytes,
                      max_lanes=65536):
    """Pick (lane_tile, k_steps, padded_HW) for the streamed reduction.

    lane_tile is a multiple of 128 and evenly divides the per-split padded
    extent; padding added is < 128 * k_steps elements per row.
    """
    lanes_from_budget = _round_down(budget_bytes // max(per_lane_bytes, 1), 128)
    t_cap = max(128, min(max_lanes, lanes_from_budget))
    raw = _cdiv(hw, n_split)            # lanes each split must cover
    n_k = _cdiv(raw, t_cap)             # reduction steps per split
    t = _round_up(_cdiv(raw, n_k), 128)
    return t, n_k, n_split * n_k * t


# --------------------------------------------------------------------------
# Wrapper
# --------------------------------------------------------------------------
@jax.jit
def compute_dice_one_hot(pred, gt):
    """Pallas implementation of computeDiceOneHot.forward.

    pred, gt: (B, C, H, W) arrays (NCHW; any float/int dtype). Only channels
    0 and 1 are used, exactly as in the PyTorch module.
    Returns (DiceN (B,2) f32, DiceB (B,2) f32, voe_mean () f32).
    """
    B, C, H, W = pred.shape
    assert C >= 2 and gt.shape[0] == B and gt.shape[1] >= 2 and gt.shape[2:] == (H, W)
    HW = H * W

    # Only channels 0/1 are used (zero-cost view when C == 2).
    p2 = pred if pred.shape[1] == 2 else pred[:, :2]
    g2 = gt if gt.shape[1] == 2 else gt[:, :2]

    rows = 2 * B
    # Pure reshapes of contiguous NCHW: rows ordered [b0c0, b0c1, b1c0, ...].
    p2 = p2.reshape(rows, HW)
    g2 = g2.reshape(rows, HW)

    # Row (batch*channel) blocking: 32 rows covers native sublane packing for
    # f32 / bf16 / int8; fall back to 16 / 8 / full-extent as divisibility allows.
    row_block = rows
    for cand in (32, 16, 8):
        if rows % cand == 0:
            row_block = cand
            break
    n_row_blocks = rows // row_block

    # If there is only one row block, split the HW reduction across a leading
    # parallel axis so both v7x TensorCores get work (harmless on v5e/v6e).
    n_split = 2 if n_row_blocks == 1 else 1

    # VMEM budget: large, but capped so the same code fits v7x's 64 MiB VMEM.
    vmem_cap = _vmem_capacity_bytes()
    vmem_limit = max(16 * 1024 * 1024,
                     min(64 * 1024 * 1024,
                         _round_down(vmem_cap * 3 // 4, 1 << 20)))
    input_budget = vmem_limit // 2      # 2 inputs x 2 pipeline buffers live here

    # Bytes per lane-column across both (double-buffered, sublane-padded) inputs.
    per_lane_bytes = 0
    for dt in (p2.dtype, g2.dtype):
        item = jnp.dtype(dt).itemsize
        sublane = max(8, 32 // max(1, item))      # 8 f32 / 16 bf16 / 32 int8
        rp = _round_up(row_block, sublane)
        per_lane_bytes += 2 * rp * item           # x2: double-buffered

    t, n_k, HW_pad = _plan_lane_tiling(HW, n_split, per_lane_bytes, input_budget)

    if HW_pad != HW:
        # Zero padding is exact: p=0 fails >=0.5, g=0 fails !=0, p*g = p+g = 0.
        p2 = jnp.pad(p2, ((0, 0), (0, HW_pad - HW)))
        g2 = jnp.pad(g2, ((0, 0), (0, HW_pad - HW)))

    in_spec = pl.BlockSpec((row_block, t), lambda j, i, k: (i, j * n_k + k))

    stats = pl.pallas_call(
        _dice_voe_stats_kernel,
        out_shape=jax.ShapeDtypeStruct((n_split, rows, 4), jnp.float32),
        grid=(n_split, n_row_blocks, n_k),
        in_specs=[in_spec, in_spec],
        out_specs=pl.BlockSpec((None, row_block, 4), lambda j, i, k: (j, i, 0)),
        compiler_params=pltpu.CompilerParams(
            dimension_semantics=("parallel", "parallel", "arbitrary"),
            vmem_limit_bytes=int(vmem_limit),
        ),
    )(p2, g2)

    # Tiny (B, 4)-scale finalization (fused by jit; negligible work).
    s = jnp.sum(stats, axis=0).reshape(B, 2, 4)
    dice_n = jnp.stack([s[:, 0, 0], s[:, 0, 1]], axis=1)
    dice_b = jnp.stack([s[:, 1, 0], s[:, 1, 1]], axis=1)

    icnt = s[:, 1, 2]
    ucnt = s[:, 1, 3] - icnt                 # inclusion-exclusion union
    # NOTE: parenthesization mirrors the PyTorch expression exactly:
    #   1 - ((inter + 1e-8) / union + 1e-8)   (eps is NOT inside the division)
    # so an all-empty channel-1 union still yields inf/NaN, as in torch.
    voe = 1.0 - ((icnt + 1e-8) / ucnt + 1e-8)
    return dice_n, dice_b, jnp.mean(voe)


# --------------------------------------------------------------------------
# Pure-JAX reference (matches the PyTorch forward)
# --------------------------------------------------------------------------
def _reference(pred, gt):
    p0, p1 = pred[:, 0].astype(jnp.float32), pred[:, 1].astype(jnp.float32)
    g0, g1 = gt[:, 0].astype(jnp.float32), gt[:, 1].astype(jnp.float32)
    dice_n = jnp.stack([jnp.sum(p0 * g0, axis=(1, 2)),
                        jnp.sum(p0, axis=(1, 2)) + jnp.sum(g0, axis=(1, 2))], axis=1)
    dice_b = jnp.stack([jnp.sum(p1 * g1, axis=(1, 2)),
                        jnp.sum(p1, axis=(1, 2)) + jnp.sum(g1, axis=(1, 2))], axis=1)
    pb = p1 >= 0.5
    gz = g1 != 0.0
    icnt = jnp.sum(jnp.logical_and(pb, gz).astype(jnp.float32), axis=(1, 2))
    ucnt = jnp.sum(jnp.logical_or(pb, gz).astype(jnp.float32), axis=(1, 2))
    voe = 1.0 - ((icnt + 1e-8) / ucnt + 1e-8)
    return dice_n, dice_b, jnp.mean(voe)


if __name__ == "__main__":
    key = jax.random.PRNGKey(0)
    k1, k2, k3, k4 = jax.random.split(key, 4)

    def make_inputs(kp, kg, B, C, H, W):
        pred = jax.random.uniform(kp, (B, C, H, W), dtype=jnp.float32)
        fg = (jax.random.uniform(kg, (B, H, W)) > 0.5).astype(jnp.float32)
        gt_ch = [1.0 - fg, fg] + [jnp.zeros_like(fg)] * (C - 2)
        gt = jnp.stack(gt_ch, axis=1)          # (B, C, H, W) NCHW
        return pred, gt

    # Case 1: aligned spatial size (HW multiple of 128), C == 2.
    pred1, gt1 = make_inputs(k1, k2, 2, 2, 16, 16)
    out1 = compute_dice_one_hot(pred1, gt1)
    jax.block_until_ready(out1)
    ref1 = _reference(pred1, gt1)
    for a, b in zip(out1, ref1):
        assert jnp.allclose(a, b, rtol=1e-5, atol=1e-5)

    # Case 2: unaligned spatial size (exercises zero-padding) and C > 2.
    pred2, gt2 = make_inputs(k3, k4, 2, 4, 10, 10)
    out2 = compute_dice_one_hot(pred2, gt2)
    jax.block_until_ready(out2)
    ref2 = _reference(pred2, gt2)
    for a, b in zip(out2, ref2):
        assert jnp.allclose(a, b, rtol=1e-5, atol=1e-5)

    print("KERNEL_OK")
</pallas_src>

<mosaic_0001>
module attributes {stable_mosaic.version = 11 : i64} {
  func.func @_dice_voe_stats_kernel(%arg0: i32, %arg1: i32, %arg2: i32, %arg3: memref<4x128xf32, #tpu.memory_space<vmem>>, %arg4: memref<4x128xf32, #tpu.memory_space<vmem>>, %arg5: memref<1x4x4xf32, #tpu.memory_space<vmem>>) attributes {dimension_semantics = [#tpu.dimension_semantics<parallel>, #tpu.dimension_semantics<parallel>, #tpu.dimension_semantics<arbitrary>], iteration_bounds = array<i64: 2, 1, 1>, scalar_prefetch = 0 : i64, scratch_operands = 0 : i64, tpu.core_type = #tpu.core_type<tc>, window_params = [{transform_indices = @transform_0, window_bounds = array<i64: 4, 128>}, {transform_indices = @transform_1, window_bounds = array<i64: 4, 128>}, {transform_indices = @transform_2, window_bounds = array<i64: 1, 4, 4>}]} {
    %c0_i32 = arith.constant 0 : i32
    %0 = arith.cmpi eq, %arg2, %c0_i32 : i32
    %1 = arith.extui %0 : i1 to i32
    %c0_i32_0 = arith.constant 0 : i32
    %2 = arith.cmpi ne, %1, %c0_i32_0 : i32
    scf.if %2 {
      %cst_15 = arith.constant 0.000000e+00 : f32
      %34 = vector.broadcast %cst_15 : f32 to vector<4x4xf32>
      %c0_16 = arith.constant 0 : index
      %c0_17 = arith.constant 0 : index
      %c0_18 = arith.constant 0 : index
      %35 = vector.load %arg5[%c0_16, %c0_17, %c0_18] : memref<1x4x4xf32, #tpu.memory_space<vmem>>, vector<1x4x4xf32>
      %36 = vector.shape_cast %35 : vector<1x4x4xf32> to vector<4x4xf32>
      %37 = vector.shape_cast %34 : vector<4x4xf32> to vector<1x4x4xf32>
      tpu.vector_store %arg5[%c0_16, %c0_17, %c0_18], %37 {strides = array<i32>} : memref<1x4x4xf32, #tpu.memory_space<vmem>>, vector<1x4x4xf32>,
    } else {
    }
    %c0 = arith.constant 0 : index
    %c0_1 = arith.constant 0 : index
    %3 = vector.load %arg3[%c0, %c0_1] : memref<4x128xf32, #tpu.memory_space<vmem>>, vector<4x128xf32>
    %c0_2 = arith.constant 0 : index
    %c0_3 = arith.constant 0 : index
    %4 = vector.load %arg4[%c0_2, %c0_3] : memref<4x128xf32, #tpu.memory_space<vmem>>, vector<4x128xf32>
    %cst = arith.constant 5.000000e-01 : f32
    %5 = vector.broadcast %cst : f32 to vector<4x128xf32>
    %6 = arith.cmpf oge, %3, %5 : vector<4x128xf32>
    %cst_4 = arith.constant 0.000000e+00 : f32
    %7 = vector.broadcast %cst_4 : f32 to vector<4x128xf32>
    %8 = arith.cmpf one, %4, %7 : vector<4x128xf32>
    %9 = arith.mulf %3, %4 : vector<4x128xf32>
    %cst_5 = arith.constant dense<0.000000e+00> : vector<4xf32>
    %10 = vector.multi_reduction <add>, %9, %cst_5 [1] : vector<4x128xf32> to vector<4xf32>
    %11 = vector.shape_cast %10 : vector<4xf32> to vector<4x1xf32>
    %12 = arith.addf %3, %4 : vector<4x128xf32>
    %cst_6 = arith.constant dense<0.000000e+00> : vector<4xf32>
    %13 = vector.multi_reduction <add>, %12, %cst_6 [1] : vector<4x128xf32> to vector<4xf32>
    %14 = vector.shape_cast %13 : vector<4xf32> to vector<4x1xf32>
    %15 = arith.andi %6, %8 : vector<4x128xi1>
    %16 = arith.extui %15 : vector<4x128xi1> to vector<4x128xi32>
    %17 = arith.sitofp %16 : vector<4x128xi32> to vector<4x128xf32>
    %cst_7 = arith.constant dense<0.000000e+00> : vector<4xf32>
    %18 = vector.multi_reduction <add>, %17, %cst_7 [1] : vector<4x128xf32> to vector<4xf32>
    %19 = vector.shape_cast %18 : vector<4xf32> to vector<4x1xf32>
    %20 = arith.extui %6 : vector<4x128xi1> to vector<4x128xi32>
    %21 = arith.sitofp %20 : vector<4x128xi32> to vector<4x128xf32>
    %22 = arith.extui %8 : vector<4x128xi1> to vector<4x128xi32>
    %23 = arith.sitofp %22 : vector<4x128xi32> to vector<4x128xf32>
    %24 = arith.addf %21, %23 : vector<4x128xf32>
    %cst_8 = arith.constant dense<0.000000e+00> : vector<4xf32>
    %25 = vector.multi_reduction <add>, %24, %cst_8 [1] : vector<4x128xf32> to vector<4xf32>
    %26 = vector.shape_cast %25 : vector<4xf32> to vector<4x1xf32>
    %c0_9 = arith.constant 0 : index
    %c0_10 = arith.constant 0 : index
    %c0_11 = arith.constant 0 : index
    %27 = vector.load %arg5[%c0_9, %c0_10, %c0_11] : memref<1x4x4xf32, #tpu.memory_space<vmem>>, vector<1x4x4xf32>
    %28 = vector.shape_cast %27 : vector<1x4x4xf32> to vector<4x4xf32>
    %29 = tpu.concatenate %11, %14, %19, %26 in 1 : vector<4x1xf32>, vector<4x1xf32>, vector<4x1xf32>, vector<4x1xf32> -> vector<4x4xf32>
    %30 = arith.addf %28, %29 : vector<4x4xf32>
    %c0_12 = arith.constant 0 : index
    %c0_13 = arith.constant 0 : index
    %c0_14 = arith.constant 0 : index
    %31 = vector.load %arg5[%c0_12, %c0_13, %c0_14] : memref<1x4x4xf32, #tpu.memory_space<vmem>>, vector<1x4x4xf32>
    %32 = vector.shape_cast %31 : vector<1x4x4xf32> to vector<4x4xf32>
    %33 = vector.shape_cast %30 : vector<4x4xf32> to vector<1x4x4xf32>
    tpu.vector_store %arg5[%c0_12, %c0_13, %c0_14], %33 {strides = array<i32>} : memref<1x4x4xf32, #tpu.memory_space<vmem>>, vector<1x4x4xf32>,
    return
  }
  func.func @transform_0(%arg0: i32, %arg1: i32, %arg2: i32) -> (i32, i32) {
    %c1_i32 = arith.constant 1 : i32
    %0 = arith.muli %arg0, %c1_i32 : i32
    %1 = arith.addi %0, %arg2 : i32
    %c0_i32 = arith.constant 0 : i32
    return %arg1, %1 : i32, i32
  }
  func.func @transform_1(%arg0: i32, %arg1: i32, %arg2: i32) -> (i32, i32) {
    %c1_i32 = arith.constant 1 : i32
    %0 = arith.muli %arg0, %c1_i32 : i32
    %1 = arith.addi %0, %arg2 : i32
    %c0_i32 = arith.constant 0 : i32
    return %arg1, %1 : i32, i32
  }
  func.func @transform_2(%arg0: i32, %arg1: i32, %arg2: i32) -> (i32, i32, i32) {
    %c0_i32 = arith.constant 0 : i32
    %c0_i32_0 = arith.constant 0 : i32
    return %arg0, %arg1, %c0_i32 : i32, i32, i32
  }
}

</mosaic_0001>

<llo_original>
// kernel: compute_dice_one_hot.1
$region0: #{compute_dice_one_hot.1}
  #allocation0 [shape = 'u32[]', space=smem, size = 0x4, offset = 0x4, fixed_abs, tag = 'smem constant byte address 0x4 - core index']
  #allocation1 [shape = 'u32[144,128]{1,0:T(1,128)}', space=vmem, size = 0x12000, scoped, tag = 'internal scratch']
  %s0 = inlined_call_operand.vmem [shape: f32[4,256], index: 0, kind: input, shape index: {}]
  %s1 = inlined_call_operand.vmem [shape: f32[4,256], index: 1, kind: input, shape index: {}]
  %s2 = inlined_call_operand.vmem [shape: f32[2,4,4], index: 2, kind: output, shape index: {}]
  %s3 = sld [smem:[#allocation0]]
  $region45: #{compute_dice_one_hot.1} parent=0
    _
  %s5 = ssub.s32 1, %s3
  %s6 = scalar_select 0, %s5, %s3
  loop: start=0, step=1, limit=4
  $region2: #{compute_dice_one_hot.1} parent=0 // loop_pre_header
    _
  $region3: #{compute_dice_one_hot.1} parent=0 // loop_header
    %s8 = sphi 0, %s12
    %p9 = scmp.ge.s32.totalorder %s8, 4
    %s15 = sphi 0, %s34
    %s16 = sphi 0, %s30
    %s17 = sphi 0, %s26
    %s18 = sphi 0, %s15
    %s19 = sphi 0, %s16
    %s20 = sphi 0, %s17
    %s21 = sphi 0, %s18
    %s22 = sphi 0, %s19
    %s23 = sphi 0, %s20
    %s41 = sphi 0, %s43
    %s44 = sphi 0, %s41
    %s45 = sphi 0, %s44
    %s61 = sphi 0, %s45
    %s71 = sphi 0, %s73
    %s74 = sphi 0, %s71
    %s75 = sphi 0, %s74
    %s91 = sphi 0, %s75
    %s99 = sphi 0, %s101
    %s102 = sphi 0, %s99
    %s103 = sphi 0, %s102
    %s119 = sphi 0, %s103
  $region4: #{compute_dice_one_hot.1} parent=0 // loop_header_branch
    %11 = sbr.rel (%p9) target = $region8
  $region5: #{compute_dice_one_hot.1} parent=0 // loop_body
    %s13 = ssub.s32 %s8, 1
    %s14 = ssub.s32 %s8, 2
    %s24 = sadd.s32 1, %s17
    %p25 = scmp.ge.s32.totalorder %s24, 1
    %s26 = scalar_select %p25, 0, %s24
    %s27 = sadd.s32 1, %s16
    %s28 = scalar_select %p25, %s27, %s16
    %p29 = scmp.ge.s32.totalorder %s28, 1
    %s30 = scalar_select %p29, 0, %s28
    %s31 = sadd.s32 1, %s15
    %s32 = scalar_select %p29, %s31, %s15
    %p33 = scmp.ge.s32.totalorder %s32, 2
    %s34 = scalar_select %p33, 0, %s32
    %s35 = sadd.s32 %s15, %s17
    %s36 = sadd.s32 %s34, %s26
    %s37 = ssub.s32 %s16, %s30
    %s38 = ssub.s32 %s35, %s36
    %s39 = sor.u32 %s37, %s38
    %p40 = scmp.eq.s32.totalorder %s39, 0
    %s42 = sadd.s32 %s41, 1
    %s43 = scalar_select %p40, %s41, %s42
    %p46 = pneg %p40
    %p47 = scmp.eq.s32.totalorder %s8, 1
    %p48 = por %p46, %p47
    %p49 = scmp.ne.s32.totalorder %s41, %s44
    %p50 = scmp.eq.s32.totalorder %s8, 0
    %p51 = por %p49, %p50
    %p52 = scmp.ne.s32.totalorder %s41, %s44
    %p53 = scmp.eq.s32.totalorder %s13, 1
    %p54 = por %p52, %p53
    %p55 = scmp.ne.s32.totalorder %s44, %s45
    %p56 = scmp.eq.s32.totalorder %s13, 0
    %p57 = por %p55, %p56
    %p58 = scmp.ne.s32.totalorder %s44, %s45
    %p59 = scmp.eq.s32.totalorder %s14, 1
    %p60 = por %p58, %p59
    %p62 = scmp.ne.s32.totalorder %s45, %s61
    %p63 = scmp.eq.s32.totalorder %s14, 0
    %p64 = por %p62, %p63
    %s65 = sadd.s32 %s15, %s17
    %s66 = sadd.s32 %s34, %s26
    %s67 = ssub.s32 %s16, %s30
    %s68 = ssub.s32 %s65, %s66
    %s69 = sor.u32 %s67, %s68
    %p70 = scmp.eq.s32.totalorder %s69, 0
    %s72 = sadd.s32 %s71, 1
    %s73 = scalar_select %p70, %s71, %s72
    %p76 = pneg %p70
    %p77 = scmp.eq.s32.totalorder %s8, 1
    %p78 = por %p76, %p77
    %p79 = scmp.ne.s32.totalorder %s71, %s74
    %p80 = scmp.eq.s32.totalorder %s8, 0
    %p81 = por %p79, %p80
    %p82 = scmp.ne.s32.totalorder %s71, %s74
    %p83 = scmp.eq.s32.totalorder %s13, 1
    %p84 = por %p82, %p83
    %p85 = scmp.ne.s32.totalorder %s74, %s75
    %p86 = scmp.eq.s32.totalorder %s13, 0
    %p87 = por %p85, %p86
    %p88 = scmp.ne.s32.totalorder %s74, %s75
    %p89 = scmp.eq.s32.totalorder %s14, 1
    %p90 = por %p88, %p89
    %p92 = scmp.ne.s32.totalorder %s75, %s91
    %p93 = scmp.eq.s32.totalorder %s14, 0
    %p94 = por %p92, %p93
    %s95 = ssub.s32 %s15, %s34
    %s96 = ssub.s32 %s16, %s30
    %s97 = sor.u32 %s95, %s96
    %p98 = scmp.eq.s32.totalorder %s97, 0
    %s100 = sadd.s32 %s99, 1
    %s101 = scalar_select %p98, %s99, %s100
    %p104 = pneg %p98
    %p105 = scmp.eq.s32.totalorder %s8, 1
    %p106 = por %p104, %p105
    %p107 = scmp.ne.s32.totalorder %s99, %s102
    %p108 = scmp.eq.s32.totalorder %s8, 0
    %p109 = por %p107, %p108
    %p110 = scmp.ne.s32.totalorder %s99, %s102
    %p111 = scmp.eq.s32.totalorder %s13, 1
    %p112 = por %p110, %p111
    %p113 = scmp.ne.s32.totalorder %s102, %s103
    %p114 = scmp.eq.s32.totalorder %s13, 0
    %p115 = por %p113, %p114
    %p116 = scmp.ne.s32.totalorder %s102, %s103
    %p117 = scmp.eq.s32.totalorder %s14, 1
    %p118 = por %p116, %p117
    %p120 = scmp.ne.s32.totalorder %s103, %s119
    %p121 = scmp.eq.s32.totalorder %s14, 0
    %p122 = por %p120, %p121
    %p123 = scmp.le.s32.totalorder 1, %s8
    %p124 = scmp.lt.s32.totalorder %s8, 3
    %p125 = pnand %p123, %p124
    %p126 = pneg %p125
    // Predicated region
    $region9: #{compute_dice_one_hot.1} parent=5 // pred_check
      _
    $region10: #{compute_dice_one_hot.1} parent=5 // pred_check_branch
      %128 = sbr.rel (%p125) target = $region12
    $region11: #{compute_dice_one_hot.1} parent=5 // pred_region
      %s129 = ssub.s32 %s8, 1
    $region12: #{compute_dice_one_hot.1} parent=5 // pred_fallthru
      _
    %p130 = scmp.lt.s32.totalorder %s8, 2
    // Predicated region
    $region13: #{compute_dice_one_hot.1} parent=5 // pred_check
      %p131 = pneg %p130
    $region14: #{compute_dice_one_hot.1} parent=5 // pred_check_branch
      %133 = sbr.rel (%p131) target = $region16
    $region15: #{compute_dice_one_hot.1} parent=5 // pred_region
      // Predicated region
      $region17: #{compute_dice_one_hot.1} parent=15 // pred_check
        %p134 = pneg %p51
      $region18: #{compute_dice_one_hot.1} parent=15 // pred_check_branch
        %136 = sbr.rel (%p134) target = $region20
      $region19: #{compute_dice_one_hot.1} parent=15 // pred_region
        %s137 = sadd.s32 %s15, %s17
        %p138 = scmp.lt.s32.totalorder %s16, 0
        %s139 = scalar_select %p138, %s16, 0
        %p140 = scmp.lt.s32.totalorder %s137, 1
        %s141 = scalar_select %p140, %s137, 1
        %s142 = smul.addr %s139, 2
        %s143 = sadd.s32 %s141, %s142
        %s144 = smul.addr %s143, 4
        %s145 = scalar_lea.vmem %s0, %s144
        %s146 = sadd.s32 %s15, %s17
      $region20: #{compute_dice_one_hot.1} parent=15 // pred_fallthru
        _
      // Predicated region
      $region21: #{compute_dice_one_hot.1} parent=15 // pred_check
        %p147 = pneg %p81
      $region22: #{compute_dice_one_hot.1} parent=15 // pred_check_branch
        %149 = sbr.rel (%p147) target = $region24
      $region23: #{compute_dice_one_hot.1} parent=15 // pred_region
        %s150 = sadd.s32 %s15, %s17
        %p151 = scmp.lt.s32.totalorder %s16, 0
        %s152 = scalar_select %p151, %s16, 0
        %p153 = scmp.lt.s32.totalorder %s150, 1
        %s154 = scalar_select %p153, %s150, 1
        %s155 = smul.addr %s152, 2
        %s156 = sadd.s32 %s154, %s155
        %s157 = smul.addr %s156, 4
        %s158 = scalar_lea.vmem %s1, %s157
        %s159 = sadd.s32 %s15, %s17
      $region24: #{compute_dice_one_hot.1} parent=15 // pred_fallthru
        _
    $region16: #{compute_dice_one_hot.1} parent=5 // pred_fallthru
      _
    %p160 = scmp.le.s32.totalorder 1, %s8
    %p161 = scmp.lt.s32.totalorder %s8, 3
    %p162 = pnand %p160, %p161
    %p163 = pneg %p162
    // Predicated region
    $region25: #{compute_dice_one_hot.1} parent=5 // pred_check
      _
    $region26: #{compute_dice_one_hot.1} parent=5 // pred_check_branch
      %165 = sbr.rel (%p162) target = $region28
    $region27: #{compute_dice_one_hot.1} parent=5 // pred_region
      %s166 = ssub.s32 %s8, 1
      %s167 = sadd.s32 %s18, %s20
      %p168 = scmp.lt.s32.totalorder %s19, 0
      %s169 = scalar_select %p168, %s19, 0
      %p170 = scmp.lt.s32.totalorder %s167, 1
      %s171 = scalar_select %p170, %s167, 1
      %s172 = smul.addr %s169, 2
      %s173 = sadd.s32 %s171, %s172
      %s174 = smul.addr %s173, 4
      %s175 = scalar_lea.vmem %s0, %s174
      %p176 = pneg %p57
      %p177 = pneg %p54
      %s178 = sadd.s32 %s18, %s20
      %p179 = scmp.lt.s32.totalorder %s19, 0
      %s180 = scalar_select %p179, %s19, 0
      %p181 = scmp.lt.s32.totalorder %s178, 1
      %s182 = scalar_select %p181, %s178, 1
      %s183 = smul.addr %s180, 2
      %s184 = sadd.s32 %s182, %s183
      %s185 = smul.addr %s184, 4
      %s186 = scalar_lea.vmem %s1, %s185
      %p187 = pneg %p87
      %p188 = pneg %p84
      %p189 = pneg %p115
      %p190 = pneg %p112
      %p191 = scmp.lt.s32.totalorder %s18, 1
      %s192 = scalar_select %p191, %s18, 1
      %p193 = scmp.lt.s32.totalorder %s19, 0
      %s194 = scalar_select %p193, %s19, 0
      %s195 = sadd.s32 %s194, %s192
      %s196 = smul.addr %s195, 4
      %s197 = scalar_lea.vmem %s2, %s196
      %s198 = sadd.s32 %s18, %s20
      %p199 = scmp.lt.s32.totalorder %s19, 0
      %s200 = scalar_select %p199, %s19, 0
      %p201 = scmp.lt.s32.totalorder %s198, 1
      %s202 = scalar_select %p201, %s198, 1
      %s203 = smul.addr %s200, 2
      %s204 = sadd.s32 %s202, %s203
      %s205 = smul.addr %s204, 4
      %s206 = scalar_lea.vmem %s0, %s205
      %s207 = sadd.s32 %s18, %s20
      %s208 = sadd.s32 %s18, %s20
      %p209 = scmp.lt.s32.totalorder %s19, 0
      %s210 = scalar_select %p209, %s19, 0
      %p211 = scmp.lt.s32.totalorder %s208, 1
      %s212 = scalar_select %p211, %s208, 1
      %s213 = smul.addr %s210, 2
      %s214 = sadd.s32 %s212, %s213
      %s215 = smul.addr %s214, 4
      %s216 = scalar_lea.vmem %s1, %s215
      %s217 = sadd.s32 %s18, %s20
      %p218 = scmp.lt.s32.totalorder %s18, 1
      %s219 = scalar_select %p218, %s18, 1
      %p220 = scmp.lt.s32.totalorder %s19, 0
      %s221 = scalar_select %p220, %s19, 0
      %s222 = sadd.s32 %s221, %s219
      %s223 = smul.addr %s222, 4
      %s224 = scalar_lea.vmem %s2, %s223
      %p225 = scmp.eq.s32.totalorder %s20, 0
      // Predicated region
      $region29: #{compute_dice_one_hot.1} parent=27 // pred_check
        %p226 = pneg %p225
      $region30: #{compute_dice_one_hot.1} parent=27 // pred_check_branch
        %228 = sbr.rel (%p226) target = $region32
      $region31: #{compute_dice_one_hot.1} parent=27 // pred_region
        %vm229 = vcmask 27648
        %230 = vst.msk [vmem:[%s224] sm:$0xf] %vm229, 0.0
      $region32: #{compute_dice_one_hot.1} parent=27 // pred_fallthru
        _
      %v231 = vld [vmem:[%s206] sm:$0xf]
      %v232 = vld [vmem:[%s216] sm:$0xf]
      %vm233 = vcmp.ge.f32.partialorder %v231, 0.5
      %vm234 = vcmp.ne.f32.partialorder %v232, 0.0
      %v235 = vmul.f32 %v231, %v232
      %vm236 = vcmask 1043456
      %v237 = vsel %vm236, %v235, 0.0
      %238 = vadd.xlane.f32.xlu0 %v237
      %v239 = vpop.xlane.xlu0 %238
      %v240 = vadd.f32 %v231, %v232
      %v241 = vsel %vm236, %v240, 0.0
      %242 = vadd.xlane.f32.xlu0 %v241
      %v243 = vpop.xlane.xlu0 %242
      %vm244 = vmand %vm233, %vm234
      %v245 = vsel %vm244, 1, 0
      %v246 = vcvt.s32.f32 %v245
      %v247 = vsel %vm236, %v246, 0.0
      %248 = vadd.xlane.f32.xlu0 %v247
      %v249 = vpop.xlane.xlu0 %248
      %v250 = vsel %vm233, 1, 0
      %v251 = vcvt.s32.f32 %v250
      %v252 = vsel %vm234, 1, 0
      %v253 = vcvt.s32.f32 %v252
      %v254 = vadd.f32 %v251, %v253
      %v255 = vsel %vm236, %v254, 0.0
      %256 = vadd.xlane.f32.xlu0 %v255
      %v257 = vpop.xlane.xlu0 %256
      %v258 = vld [vmem:[%s224] sm:$0xf]
      %vm259 = vcmask 7168
      %v260 = vsel %vm259, %v239, %v243
      %vm261 = vcmask 15360
      %v262 = vsel %vm261, %v260, %v249
      %vm263 = vcmask 23552
      %v264 = vsel %vm263, %v262, %v257
      %v265 = vadd.f32 %v258, %v264
      %vm266 = vcmask 27648
      %267 = vst.msk [vmem:[%s224] sm:$0xf] %vm266, %v265
      %p268 = scmp.lt.s32.totalorder %s18, 1
      %s269 = scalar_select %p268, %s18, 1
      %p270 = scmp.lt.s32.totalorder %s19, 0
      %s271 = scalar_select %p270, %s19, 0
      %s272 = sadd.s32 %s271, %s269
      %s273 = smul.addr %s272, 4
      %s274 = scalar_lea.vmem %s2, %s273
      // Predicated region
      $region33: #{compute_dice_one_hot.1} parent=27 // pred_check
        %p275 = pneg %p112
      $region34: #{compute_dice_one_hot.1} parent=27 // pred_check_branch
        %277 = sbr.rel (%p275) target = $region36
      $region35: #{compute_dice_one_hot.1} parent=27 // pred_region
        _
      $region36: #{compute_dice_one_hot.1} parent=27 // pred_fallthru
        _
    $region28: #{compute_dice_one_hot.1} parent=5 // pred_fallthru
      _
    %p278 = scmp.le.s32.totalorder 2, %s8
    // Predicated region
    $region37: #{compute_dice_one_hot.1} parent=5 // pred_check
      %p279 = pneg %p278
    $region38: #{compute_dice_one_hot.1} parent=5 // pred_check_branch
      %281 = sbr.rel (%p279) target = $region40
    $region39: #{compute_dice_one_hot.1} parent=5 // pred_region
      %s282 = ssub.s32 %s8, 2
      // Predicated region
      $region41: #{compute_dice_one_hot.1} parent=39 // pred_check
        %p283 = pneg %p118
      $region42: #{compute_dice_one_hot.1} parent=39 // pred_check_branch
        %285 = sbr.rel (%p283) target = $region44
      $region43: #{compute_dice_one_hot.1} parent=39 // pred_region
        %p286 = scmp.lt.s32.totalorder %s21, 1
        %s287 = scalar_select %p286, %s21, 1
        %p288 = scmp.lt.s32.totalorder %s22, 0
        %s289 = scalar_select %p288, %s22, 0
        %s290 = sadd.s32 %s289, %s287
        %s291 = smul.addr %s290, 4
        %s292 = scalar_lea.vmem %s2, %s291
      $region44: #{compute_dice_one_hot.1} parent=39 // pred_fallthru
        _
    $region40: #{compute_dice_one_hot.1} parent=5 // pred_fallthru
      _
  $region6: #{compute_dice_one_hot.1} parent=0 // loop_footer
    %s12 = sadd.s32 1, %s8
  $region7: #{compute_dice_one_hot.1} parent=0 // loop_footer_branch
    %7 = sbr.rel target = $region3
  $region8: #{compute_dice_one_hot.1} parent=0 // loop_exit
    _

</llo_original>
